<compile_context>
chip_gen: v7x
topology: tpu7x:2x2x1
jax: 0.10.0
libtpu: 0.0.40
codegen_flags: <defaults>
</compile_context>

<pallas_src>
import jax
import jax.numpy as jnp
from jax.experimental import pallas as pl
from jax.experimental.pallas import tpu as pltpu

_LANE = 128                     # TPU lane width
_MAX_LANE = 2048                # cap on flattened last dim of the 2-D view
_MAX_DMA_CHUNKS = 8             # max concurrent HBM->HBM DMAs per copy
_MIN_COPY_BYTES = 256 * 1024    # below this a pallas_call costs more than it moves


def _make_chunked_copy_kernel(bounds):
    """Kernel factory: HBM->HBM DMA identity copy, chunked along the leading axis.

    `bounds` is a static tuple of (row_start, row_size) pairs.  All chunk DMAs
    are issued back-to-back (several transfers in flight on the DMA engines),
    then waited on.  No grid, no VMEM staging, no vld/vst in the body.
    """
    def kernel(x_ref, o_ref, sems):
        copies = []
        for idx, (start, size) in enumerate(bounds):
            cp = pltpu.make_async_copy(
                x_ref.at[pl.ds(start, size)],
                o_ref.at[pl.ds(start, size)],
                sems.at[idx],
            )
            cp.start()
            copies.append(cp)
        for cp in copies:
            cp.wait()
    return kernel


def _row_chunk_bounds(rows: int):
    """Split `rows` into <=_MAX_DMA_CHUNKS contiguous ranges with 8-row-aligned
    starts/sizes (last chunk takes the remainder)."""
    n_target = min(_MAX_DMA_CHUNKS, max(1, rows // 8))
    chunk = -(-rows // n_target)          # ceil divide
    chunk = -(-chunk // 8) * 8            # round up to sublane-tile multiple
    bounds = []
    start = 0
    while start < rows:
        size = min(chunk, rows - start)
        bounds.append((start, size))
        start += size
    return tuple(bounds)


def _pallas_hbm_copy(x: jax.Array) -> jax.Array:
    """Materialized identity copy of `x` via chunked HBM->HBM DMA (no VMEM)."""
    total = x.size
    if total == 0:
        return x
    orig_shape = x.shape

    if total % _LANE == 0:
        # Lane-dense 2-D view (contiguous reshape == metadata only); chunk over
        # rows so several DMAs can be in flight.
        lane = _LANE
        while lane * 2 <= _MAX_LANE and total % (lane * 2) == 0:
            lane *= 2
        rows = total // lane
        view = x.reshape(rows, lane)
        bounds = _row_chunk_bounds(rows)
    else:
        # Element count not a multiple of 128: single whole-array DMA.  Since
        # the copy never stages through VMEM there is no VMEM budget to exceed,
        # regardless of array size.
        view = x if x.ndim >= 1 else x.reshape(1)
        bounds = ((0, view.shape[0]),)

    n_chunks = len(bounds)
    out = pl.pallas_call(
        _make_chunked_copy_kernel(bounds),
        out_shape=jax.ShapeDtypeStruct(view.shape, view.dtype),
        in_specs=[pl.BlockSpec(memory_space=pl.ANY)],
        out_specs=pl.BlockSpec(memory_space=pl.ANY),
        scratch_shapes=[pltpu.SemaphoreType.DMA((n_chunks,))],
    )(view)
    return out.reshape(orig_shape)


def unsqueeze_forward(x: jax.Array, expected_dim: int, *, materialize: bool = False) -> jax.Array:
    """JAX/Pallas equivalent of Unsqueeze.forward.

    Default path is metadata-only (zero data movement), matching the PyTorch
    semantics exactly.  `materialize=True` forces an explicit copy through the
    chunked HBM->HBM DMA kernel (tiny tensors still short-circuit, since the
    launch overhead would dominate).
    """
    if (materialize and x.size > 0
            and x.size * jnp.dtype(x.dtype).itemsize >= _MIN_COPY_BYTES):
        x = _pallas_hbm_copy(x)
    if x.ndim == expected_dim - 1:
        return jnp.expand_dims(x, 0)  # metadata-only, zero-cost
    return x


if __name__ == "__main__":
    key = jax.random.PRNGKey(0)
    k1, k2, k3, k4 = jax.random.split(key, 4)

    expected_dim = 4

    # Case 1: un-batched input [C, H, W] -> expect [1, C, H, W] (metadata only).
    x_unbatched = jax.random.normal(k1, (4, 16, 16), dtype=jnp.float32)
    y1 = unsqueeze_forward(x_unbatched, expected_dim)
    jax.block_until_ready(y1)
    assert y1.shape == (1, 4, 16, 16), y1.shape
    assert bool(jnp.array_equal(y1[0], x_unbatched)), "unsqueeze mismatch"

    # Case 2: already-batched input [N, C, H, W] -> passes through unchanged.
    x_batched = jax.random.normal(k2, (2, 4, 16, 16), dtype=jnp.float32)
    y2 = unsqueeze_forward(x_batched, expected_dim)
    jax.block_until_ready(y2)
    assert y2.shape == (2, 4, 16, 16), y2.shape
    assert bool(jnp.array_equal(y2, x_batched)), "identity mismatch"

    # Exercise the Pallas HBM->HBM DMA copy kernel (lane-dense chunked path).
    y3 = _pallas_hbm_copy(x_batched)
    jax.block_until_ready(y3)
    assert y3.shape == x_batched.shape
    assert bool(jnp.array_equal(y3, x_batched)), "DMA copy mismatch (2D path)"

    # Exercise the non-multiple-of-128 fallback (single whole-array DMA).
    x_odd = jax.random.normal(k3, (3, 5, 7), dtype=jnp.float32)  # 105 elems
    y4 = _pallas_hbm_copy(x_odd)
    jax.block_until_ready(y4)
    assert bool(jnp.array_equal(y4, x_odd)), "DMA copy mismatch (odd path)"

    # Materialized forward on a tensor above the short-circuit threshold
    # (512 KiB -> multi-chunk DMA path + metadata unsqueeze).
    x_big = jax.random.normal(k4, (64, 32, 32), dtype=jnp.float32)
    y5 = unsqueeze_forward(x_big, expected_dim, materialize=True)
    jax.block_until_ready(y5)
    assert y5.shape == (1, 64, 32, 32), y5.shape
    assert bool(jnp.array_equal(y5[0], x_big)), "materialized unsqueeze mismatch"

    print("KERNEL_OK")
</pallas_src>

<mosaic_0001>
module attributes {stable_mosaic.version = 11 : i64} {
  func.func @kernel(%arg0: memref<1x2048xf32, #tpu.memory_space<any>>, %arg1: memref<1x2048xf32, #tpu.memory_space<any>>, %arg2: memref<1x!tpu.dma_semaphore, #tpu.memory_space<semaphore_mem>>) attributes {dimension_semantics = [], scalar_prefetch = 0 : i64, scratch_operands = 1 : i64, tpu.core_type = #tpu.core_type<tc>} {
    %c0_i32 = arith.constant 0 : i32
    %c0_i32_0 = arith.constant 0 : i32
    %c0_i32_1 = arith.constant 0 : i32
    %0 = tpu.memref_slice %arg0[%c0_i32_0, %c0_i32_1] : memref<1x2048xf32, #tpu.memory_space<any>> -> memref<1x2048xf32, #tpu.memory_space<any>>
    %c0_i32_2 = arith.constant 0 : i32
    %c0_i32_3 = arith.constant 0 : i32
    %1 = tpu.memref_slice %arg1[%c0_i32_2, %c0_i32_3] : memref<1x2048xf32, #tpu.memory_space<any>> -> memref<1x2048xf32, #tpu.memory_space<any>>
    %2 = tpu.memref_slice %arg2[%c0_i32] : memref<1x!tpu.dma_semaphore, #tpu.memory_space<semaphore_mem>> -> memref<1x!tpu.dma_semaphore, #tpu.memory_space<semaphore_mem>>
    %3 = tpu.memref_squeeze %2 : memref<1x!tpu.dma_semaphore, #tpu.memory_space<semaphore_mem>> -> memref<!tpu.dma_semaphore, #tpu.memory_space<semaphore_mem>>
    tpu.enqueue_dma source(%0 : memref<1x2048xf32, #tpu.memory_space<any>>) target(%1 : memref<1x2048xf32, #tpu.memory_space<any>>) target_semaphore(%3 : memref<!tpu.dma_semaphore, #tpu.memory_space<semaphore_mem>>)
    %c0_i32_4 = arith.constant 0 : i32
    %c0_i32_5 = arith.constant 0 : i32
    %c0_i32_6 = arith.constant 0 : i32
    %4 = tpu.memref_slice %arg0[%c0_i32_5, %c0_i32_6] : memref<1x2048xf32, #tpu.memory_space<any>> -> memref<1x2048xf32, #tpu.memory_space<any>>
    %c0_i32_7 = arith.constant 0 : i32
    %c0_i32_8 = arith.constant 0 : i32
    %5 = tpu.memref_slice %arg1[%c0_i32_7, %c0_i32_8] : memref<1x2048xf32, #tpu.memory_space<any>> -> memref<1x2048xf32, #tpu.memory_space<any>>
    %6 = tpu.memref_slice %arg2[%c0_i32_4] : memref<1x!tpu.dma_semaphore, #tpu.memory_space<semaphore_mem>> -> memref<1x!tpu.dma_semaphore, #tpu.memory_space<semaphore_mem>>
    %7 = tpu.memref_squeeze %6 : memref<1x!tpu.dma_semaphore, #tpu.memory_space<semaphore_mem>> -> memref<!tpu.dma_semaphore, #tpu.memory_space<semaphore_mem>>
    tpu.wait_dma2 semaphore(%7 : memref<!tpu.dma_semaphore, #tpu.memory_space<semaphore_mem>>) src(%4 : memref<1x2048xf32, #tpu.memory_space<any>>) dst(%5 : memref<1x2048xf32, #tpu.memory_space<any>>)
    return
  }
}

</mosaic_0001>

<llo_original>
// kernel: tpu_custom_call.1
$region0: #{tpu_custom_call.1}
  #allocation0 [shape = 'u32[]', space=smem, size = 0x4, offset = 0x4, fixed_abs, tag = 'smem constant byte address 0x4 - core index']
  #allocation1 [shape = 'u32[144,128]{1,0:T(1,128)}', space=vmem, size = 0x12000, scoped, tag = 'internal scratch']
  #allocation2 [shape = 's32[1]{0}', space=sflag, size = 0x4, scoped, tag = 'scratch operand']
  #allocation3 [shape = 's32[]', space=sflag, size = 0x4, offset = 0, fixed_abs, tag = 'sflag constant byte address 0x0 - dummy sync flag']
  #allocation4 [shape = 'u32[0]{0}', space=smem, size = 0, offset = 0, fixed_abs, tag = 'smem constant byte address 0x0 - null']
  %s0 = inlined_call_operand.hbm [shape: f32[1,2048], index: 0, kind: input, shape index: {}]
  %s1 = inlined_call_operand.hbm [shape: f32[1,2048], index: 1, kind: output, shape index: {}]
  %s2 = sld [smem:[#allocation0]]
  $region2: #{tpu_custom_call.1} parent=0
    _
  %s4 = ssub.s32 1, %s2
  %s5 = scalar_select 0, %s4, %s2
  %s7 = sshll.u32 1, 14
  %s8 = sxor.u32 4294967295, %s7
  %s11 = sshll.u32 3, 24
  %s12 = sxor.u32 4294967295, %s11
  %s13 = sand.u32 0, %s12
  %s15 = sor.u32 %s13, 0
  %18 = dma.general %s0, 256, %s1, [#allocation2], [#allocation3], [#allocation4], %s15, 0
  %s19 = smul.u32 1, 16
  %s20 = sshll.u32 %s19, 4
  %21 = dma.done [#allocation2], %s20
  %22 = vsyncmov [#allocation2]
  %s23 = vpop.sfrf %22
  %p24 = scmp.eq.s32.totalorder %s23, 0
  %p25 = pneg %p24
  %27 = shalt.err (%p25)

</llo_original>
